<compile_context>
chip_gen: v6e
topology: v6e:2x2x1
jax: 0.10.0
libtpu: 0.0.40
codegen_flags: <defaults>
</compile_context>

<pallas_src>
import jax
import jax.numpy as jnp
from jax.experimental import pallas as pl
from jax.experimental.pallas import tpu as pltpu

LANE = 128
SUBLANE = 8
GROUP_ROWS = 256                      # rows per fused inner-loop slab
TARGET_BLOCK_BYTES = 4 * 1024 * 1024  # HBM-side DMA granularity per grid step


def _make_kernel(*, block_rows, group_rows, total_rows, ragged):
    """Build the streaming partial-moments kernel (statics baked in)."""
    n_groups = block_rows // group_rows
    sub_per_group = group_rows // SUBLANE

    def kernel(x_ref, sum_ref, sq_ref):
        step = pl.program_id(1)

        @pl.when(step == 0)
        def _init():
            sum_ref[...] = jnp.zeros_like(sum_ref)
            sq_ref[...] = jnp.zeros_like(sq_ref)

        zero = jnp.zeros((SUBLANE, LANE), jnp.float32)

        def group_body(g, carry):
            # Fused single pass: each loaded vreg feeds BOTH accumulators.
            s_acc, q_acc = carry
            off = pl.multiple_of(g * group_rows, group_rows)
            v = x_ref[pl.ds(off, group_rows), :].astype(jnp.float32)
            v3 = v.reshape(sub_per_group, SUBLANE, LANE)
            return s_acc + jnp.sum(v3, axis=0), q_acc + jnp.sum(v3 * v3, axis=0)

        def commit(acc):
            s_acc, q_acc = acc
            sum_ref[...] += s_acc
            sq_ref[...] += q_acc

        if not ragged:
            # Every block is full: fast path only.
            commit(jax.lax.fori_loop(0, n_groups, group_body, (zero, zero)))
        else:
            gb = pl.program_id(0) * pl.num_programs(1) + step
            # Valid rows in this block: block_rows for full blocks, fewer for
            # the tail block, 0 for the duplicated (grid-padding) block.
            valid = jnp.minimum(
                jnp.maximum(total_rows - gb * block_rows, 0), block_rows)

            @pl.when(valid == block_rows)          # full block: fast path
            def _full():
                commit(jax.lax.fori_loop(0, n_groups, group_body, (zero, zero)))

            @pl.when(valid < block_rows)           # tail / duplicated block
            def _tail():
                # Full 256-row groups first (fast), then walk the one partial
                # group at (8,128) granularity with an iota row mask.  Stale
                # rows of the partial DMA'd block are masked before use.
                n_full = valid // group_rows
                acc = jax.lax.fori_loop(0, n_full, group_body, (zero, zero))
                base = n_full * group_rows
                rid = jax.lax.broadcasted_iota(jnp.int32, (SUBLANE, LANE), 0)

                def sub_body(t, carry):
                    s_acc, q_acc = carry
                    off = pl.multiple_of(base + t * SUBLANE, SUBLANE)
                    v = x_ref[pl.ds(off, SUBLANE), :].astype(jnp.float32)
                    v = jnp.where(rid < valid - base - t * SUBLANE, v, 0.0)
                    return s_acc + v, q_acc + v * v

                commit(jax.lax.fori_loop(0, sub_per_group, sub_body, acc))

    return kernel


def var_population(x: jax.Array) -> jax.Array:
    """Population variance of all elements of x (torch.var(x, unbiased=False))."""
    total = int(x.size)
    flat = x.reshape(-1)                      # native dtype, no wrapper cast
    itemsize = x.dtype.itemsize
    row_align = max(SUBLANE, 32 // itemsize)  # sublane packing: 8/16/32
    rows_needed = pl.cdiv(total, LANE)

    if rows_needed < GROUP_ROWS:
        # Tiny input (< 32K elements): a single small block; cheap pad below.
        rows = pl.cdiv(rows_needed, row_align) * row_align
        block_rows = rows
        group_rows = rows
    else:
        rows = rows_needed
        # Byte-sized blocks: ~4 MiB of the native dtype per grid step.
        target_rows = max(
            GROUP_ROWS,
            (TARGET_BLOCK_BYTES // (LANE * itemsize)) // GROUP_ROWS * GROUP_ROWS)
        block_rows = min(target_rows, (rows // GROUP_ROWS) * GROUP_ROWS)
        group_rows = GROUP_ROWS

    padded = rows * LANE
    if padded != total:
        # TODO(synk): this concatenate copies the input once; it only triggers
        # when numel is not a multiple of 128 (or for tiny inputs). Lane-aligned
        # tensors — the common case — take the zero-copy reshape below.
        flat = jnp.concatenate([flat, jnp.zeros((padded - total,), flat.dtype)])
    x2d = flat.reshape(rows, LANE)

    n_blocks = pl.cdiv(rows, block_rows)
    num_chunks = 2 if n_blocks >= 2 else 1     # guaranteed 2-TC split on v7x
    steps = pl.cdiv(n_blocks, num_chunks)
    padded_grid = (num_chunks * steps) != n_blocks
    ragged = (rows % block_rows != 0) or padded_grid

    if padded_grid:
        last = n_blocks - 1                    # clamp the duplicated block; it
        in_index_map = lambda p, s: (jnp.minimum(p * steps + s, last), 0)
    else:                                      # contributes zero via masking
        in_index_map = lambda p, s: (p * steps + s, 0)

    kernel = _make_kernel(block_rows=block_rows, group_rows=group_rows,
                          total_rows=rows, ragged=ragged)

    # NOTE: pipeline_mode=pl.Buffered(3) on the input would hide a bit more DMA
    # jitter; left at the default double-buffering for portability.
    sums, sqs = pl.pallas_call(
        kernel,
        out_shape=(
            jax.ShapeDtypeStruct((num_chunks * SUBLANE, LANE), jnp.float32),
            jax.ShapeDtypeStruct((num_chunks * SUBLANE, LANE), jnp.float32),
        ),
        grid_spec=pltpu.PrefetchScalarGridSpec(
            num_scalar_prefetch=0,
            grid=(num_chunks, steps),
            in_specs=[pl.BlockSpec((block_rows, LANE), in_index_map)],
            out_specs=[
                pl.BlockSpec((SUBLANE, LANE), lambda p, s: (p, 0)),
                pl.BlockSpec((SUBLANE, LANE), lambda p, s: (p, 0)),
            ],
        ),
        compiler_params=pltpu.CompilerParams(
            dimension_semantics=("parallel", "arbitrary"),
            vmem_limit_bytes=32 * 1024 * 1024,
        ),
    )(x2d)

    # Tiny final combine (<= 2048 partials) outside the kernel.
    # TODO(synk): E[x^2] - E[x]^2 can cancel when |mean| >> std; a mean-shifted
    # (Welford-style) partial combine would be more robust for such inputs.
    inv_n = jnp.float32(1.0) / jnp.float32(total)
    total_sum = jnp.sum(sums)
    total_sq = jnp.sum(sqs)
    mean = total_sum * inv_n
    return total_sq * inv_n - mean * mean


class MyModelPallas:
    """Mirror of the PyTorch MyModel: forward(x) -> [var(x, unbiased=False)]."""

    def __call__(self, x):
        return [var_population(x)]


if __name__ == "__main__":
    model = MyModelPallas()

    # Primary input: NCHW, small shape consistent with the module's forward.
    x = jax.random.normal(jax.random.PRNGKey(0), (2, 4, 16, 16), dtype=jnp.float32)
    (out,) = model(x)
    out = jax.block_until_ready(out)
    ref = jnp.var(x)  # population variance (ddof=0) == torch.var(unbiased=False)
    assert jnp.allclose(out, ref, rtol=1e-5, atol=1e-5), (out, ref)

    # Ragged (non lane-aligned) tiny input: exercises the small pad fallback.
    x2 = jax.random.normal(jax.random.PRNGKey(0), (3, 5, 7), dtype=jnp.float32)
    out2 = jax.block_until_ready(var_population(x2))
    ref2 = jnp.var(x2)
    assert jnp.allclose(out2, ref2, rtol=1e-5, atol=1e-5), (out2, ref2)

    # Multi-block streaming input: exercises the 2-way parallel split, the
    # odd-block-count grid padding (clamped duplicate block) and the in-kernel
    # masked tail block — all with zero wrapper-side copies.
    x3 = jax.random.normal(jax.random.PRNGKey(0), (16500, 128), dtype=jnp.float32)
    out3 = jax.block_until_ready(var_population(x3))
    ref3 = jnp.var(x3)
    assert jnp.allclose(out3, ref3, rtol=1e-4, atol=1e-4), (out3, ref3)

    print("KERNEL_OK")
</pallas_src>

<mosaic_0001>
module attributes {stable_mosaic.version = 11 : i64} {
  func.func @kernel(%arg0: i32, %arg1: i32, %arg2: memref<16x128xf32, #tpu.memory_space<vmem>>, %arg3: memref<8x128xf32, #tpu.memory_space<vmem>>, %arg4: memref<8x128xf32, #tpu.memory_space<vmem>>) attributes {dimension_semantics = [#tpu.dimension_semantics<parallel>, #tpu.dimension_semantics<arbitrary>], iteration_bounds = array<i64: 1, 1>, scalar_prefetch = 0 : i64, scratch_operands = 0 : i64, tpu.core_type = #tpu.core_type<tc>, window_params = [{transform_indices = @transform_0, window_bounds = array<i64: 16, 128>}, {transform_indices = @transform_1, window_bounds = array<i64: 8, 128>}, {transform_indices = @transform_2, window_bounds = array<i64: 8, 128>}]} {
    %c0_i32 = arith.constant 0 : i32
    %0 = arith.cmpi eq, %arg1, %c0_i32 : i32
    %1 = arith.extui %0 : i1 to i32
    %c0_i32_0 = arith.constant 0 : i32
    %2 = arith.cmpi ne, %1, %c0_i32_0 : i32
    scf.if %2 {
      %cst_12 = arith.constant 0.000000e+00 : f32
      %20 = vector.broadcast %cst_12 : f32 to vector<8x128xf32>
      %c0_13 = arith.constant 0 : index
      %c0_14 = arith.constant 0 : index
      %21 = vector.load %arg3[%c0_13, %c0_14] : memref<8x128xf32, #tpu.memory_space<vmem>>, vector<8x128xf32>
      tpu.vector_store %arg3[%c0_13, %c0_14], %20 {strides = array<i32>} : memref<8x128xf32, #tpu.memory_space<vmem>>, vector<8x128xf32>,
      %cst_15 = arith.constant 0.000000e+00 : f32
      %22 = vector.broadcast %cst_15 : f32 to vector<8x128xf32>
      %c0_16 = arith.constant 0 : index
      %c0_17 = arith.constant 0 : index
      %23 = vector.load %arg4[%c0_16, %c0_17] : memref<8x128xf32, #tpu.memory_space<vmem>>, vector<8x128xf32>
      tpu.vector_store %arg4[%c0_16, %c0_17], %22 {strides = array<i32>} : memref<8x128xf32, #tpu.memory_space<vmem>>, vector<8x128xf32>,
    } else {
    }
    %cst = arith.constant 0.000000e+00 : f32
    %3 = vector.broadcast %cst : f32 to vector<8x128xf32>
    %c0_i32_1 = arith.constant 0 : i32
    %c16_i32 = arith.constant 16 : i32
    %4 = arith.muli %c0_i32_1, %c16_i32 : i32
    %5 = tpu.assume_multiple %4, 16 : i32
    %6 = arith.index_cast %5 : i32 to index
    %c0 = arith.constant 0 : index
    %7 = vector.load %arg2[%6, %c0] : memref<16x128xf32, #tpu.memory_space<vmem>>, vector<16x128xf32>
    %8 = vector.shape_cast %7 : vector<16x128xf32> to vector<2x8x128xf32>
    %cst_2 = arith.constant dense<0.000000e+00> : vector<8x128xf32>
    %9 = vector.multi_reduction <add>, %8, %cst_2 [0] : vector<2x8x128xf32> to vector<8x128xf32>
    %10 = arith.addf %3, %9 : vector<8x128xf32>
    %11 = arith.mulf %8, %8 : vector<2x8x128xf32>
    %cst_3 = arith.constant dense<0.000000e+00> : vector<8x128xf32>
    %12 = vector.multi_reduction <add>, %11, %cst_3 [0] : vector<2x8x128xf32> to vector<8x128xf32>
    %13 = arith.addf %3, %12 : vector<8x128xf32>
    %c1_i32 = arith.constant 1 : i32
    %c0_4 = arith.constant 0 : index
    %c0_5 = arith.constant 0 : index
    %14 = vector.load %arg3[%c0_4, %c0_5] : memref<8x128xf32, #tpu.memory_space<vmem>>, vector<8x128xf32>
    %15 = arith.addf %14, %10 : vector<8x128xf32>
    %c0_6 = arith.constant 0 : index
    %c0_7 = arith.constant 0 : index
    %16 = vector.load %arg3[%c0_6, %c0_7] : memref<8x128xf32, #tpu.memory_space<vmem>>, vector<8x128xf32>
    tpu.vector_store %arg3[%c0_6, %c0_7], %15 {strides = array<i32>} : memref<8x128xf32, #tpu.memory_space<vmem>>, vector<8x128xf32>,
    %c0_8 = arith.constant 0 : index
    %c0_9 = arith.constant 0 : index
    %17 = vector.load %arg4[%c0_8, %c0_9] : memref<8x128xf32, #tpu.memory_space<vmem>>, vector<8x128xf32>
    %18 = arith.addf %17, %13 : vector<8x128xf32>
    %c0_10 = arith.constant 0 : index
    %c0_11 = arith.constant 0 : index
    %19 = vector.load %arg4[%c0_10, %c0_11] : memref<8x128xf32, #tpu.memory_space<vmem>>, vector<8x128xf32>
    tpu.vector_store %arg4[%c0_10, %c0_11], %18 {strides = array<i32>} : memref<8x128xf32, #tpu.memory_space<vmem>>, vector<8x128xf32>,
    return
  }
  func.func @transform_0(%arg0: i32, %arg1: i32) -> (i32, i32) {
    %c1_i32 = arith.constant 1 : i32
    %0 = arith.muli %arg0, %c1_i32 : i32
    %1 = arith.addi %0, %arg1 : i32
    %c0_i32 = arith.constant 0 : i32
    %c0_i32_0 = arith.constant 0 : i32
    return %1, %c0_i32 : i32, i32
  }
  func.func @transform_1(%arg0: i32, %arg1: i32) -> (i32, i32) {
    %c0_i32 = arith.constant 0 : i32
    %c0_i32_0 = arith.constant 0 : i32
    return %arg0, %c0_i32 : i32, i32
  }
  func.func @transform_2(%arg0: i32, %arg1: i32) -> (i32, i32) {
    %c0_i32 = arith.constant 0 : i32
    %c0_i32_0 = arith.constant 0 : i32
    return %arg0, %c0_i32 : i32, i32
  }
}

</mosaic_0001>

<llo_original>
// kernel: tpu_custom_call.1
$region0: #{tpu_custom_call.1}
  #allocation0 [shape = 'u32[]', space=smem, size = 0x4, offset = 0x4, fixed_abs, tag = 'smem constant byte address 0x4 - core index']
  #allocation1 [shape = 'u32[144,128]{1,0:T(1,128)}', space=vmem, size = 0x12000, scoped, tag = 'internal scratch']
  %s0 = inlined_call_operand.hbm [shape: f32[16,128], index: 0, kind: input, shape index: {}]
  %s1 = inlined_call_operand.hbm [shape: f32[8,128], index: 1, kind: output, shape index: {0}]
  %s2 = inlined_call_operand.hbm [shape: f32[8,128], index: 2, kind: output, shape index: {1}]
  %3 = xla_tuple %s1, %s2
  %s4 = sld [smem:[#allocation0]]
  $region30: #{tpu_custom_call.1} parent=0
    _
  %s6 = ssub.s32 1, %s4
  %s7 = scalar_select 0, %s6, %s4
  $region1: #{tpu_custom_call.1} parent=0
    #allocation2 [shape = 'u8[8192]{0}', space=vmem, size = 0x2000, scoped, tag = 'input window, operand 0, single buffered']
    #allocation3 [shape = 's32[1]{0}', space=sflag, size = 0x4, scoped, tag = 'scoped memory for tpu_custom_call.1']
    #allocation4 [shape = 's32[1]{0}', space=sflag, size = 0x4, scoped, tag = 'scoped memory for tpu_custom_call.1']
    #allocation5 [shape = 'u8[4096]{0}', space=vmem, size = 0x1000, scoped, tag = 'output window, operand 0, single buffered']
    #allocation6 [shape = 'u8[4096]{0}', space=vmem, size = 0x1000, scoped, tag = 'output window, operand 1, single buffered']
    #allocation7 [shape = 's32[1]{0}', space=sflag, size = 0x4, scoped, tag = 'scoped memory for tpu_custom_call.1']
    %8 = vsyncpa [#allocation3], 0
    %9 = vsyncpa [#allocation4], 0
    %10 = vsyncpa [#allocation7], 0
    // Predicated region
    $region2: #{tpu_custom_call.1} parent=1 // pred_check
      _
    $region3: #{tpu_custom_call.1} parent=1 // pred_check_branch
      %12 = sbr.rel (0) target = $region5
    $region4: #{tpu_custom_call.1} parent=1 // pred_region
      %s13 = sadd.s32 0, 0
      %s14 = smul.u32 2, %s13
      %s16 = ssub.s32 256, 256
      %17 = vsyncadd [#allocation3], %s16
      %s18 = smul.addr %s14, 128
      %s19 = scalar_lea.hbm %s0, %s18
      %s20 = sshll.u32 [#allocation2], 4
      %s21 = int_to_ptr.vmem [resolvable:$true] %s20
      %26 = dma.hbm_to_vmem [thread:$0]  %s19, 256, %s21, [#allocation3], 128, 128, 8
    $region5: #{tpu_custom_call.1} parent=1 // pred_fallthru
      _
    // Predicated region
    $region6: #{tpu_custom_call.1} parent=1 // pred_check
      _
    $region7: #{tpu_custom_call.1} parent=1 // pred_check_branch
      %28 = sbr.rel (0) target = $region9
    $region8: #{tpu_custom_call.1} parent=1 // pred_region
      %29 = dma.done [#allocation3], 256
    $region9: #{tpu_custom_call.1} parent=1 // pred_fallthru
      _
    %s30 = sadd.s32 0, 0
    %s31 = smul.u32 2, %s30
    %p32 = scmp.eq.s32.totalorder 0, 0
    // Predicated region
    $region10: #{tpu_custom_call.1} parent=1 // pred_check
      %p33 = pneg %p32
    $region11: #{tpu_custom_call.1} parent=1 // pred_check_branch
      %35 = sbr.rel (%p33) target = $region13
    $region12: #{tpu_custom_call.1} parent=1 // pred_region
      %36 = vst [vmem:[#allocation5] sm:$0xff] 0.0
      %37 = vst [vmem:[#allocation6] sm:$0xff] 0.0
    $region13: #{tpu_custom_call.1} parent=1 // pred_fallthru
      _
    %v38 = vld [vmem:[#allocation2] sm:$0xff]
    %v39 = vld [vmem:[#allocation2 + $0x8] sm:$0xff]
    %v40 = vadd.f32 %v38, %v39
    %v41 = vadd.f32 %v40, 0.0
    %v42 = vmul.f32 %v38, %v38
    %v43 = vmul.f32 %v39, %v39
    %v44 = vadd.f32 %v42, %v43
    %v45 = vadd.f32 %v44, 0.0
    %v46 = vld [vmem:[#allocation5] sm:$0xff]
    %v47 = vadd.f32 %v46, %v41
    %48 = vst [vmem:[#allocation5] sm:$0xff] %v47
    %v49 = vld [vmem:[#allocation6] sm:$0xff]
    %v50 = vadd.f32 %v49, %v45
    %51 = vst [vmem:[#allocation6] sm:$0xff] %v50
    // Predicated region
    $region14: #{tpu_custom_call.1} parent=1 // pred_check
      _
    $region15: #{tpu_custom_call.1} parent=1 // pred_check_branch
      %53 = sbr.rel (0) target = $region17
    $region16: #{tpu_custom_call.1} parent=1 // pred_region
      %s55 = ssub.s32 128, 128
      %56 = vsyncadd [#allocation4], %s55
      %s58 = sshll.u32 [#allocation5], 4
      %s59 = int_to_ptr.vmem [resolvable:$true] %s58
      %61 = dma.vmem_to_hbm [thread:$0]  %s59, 128, %s1, [#allocation4]
    $region17: #{tpu_custom_call.1} parent=1 // pred_fallthru
      _
    // Predicated region
    $region18: #{tpu_custom_call.1} parent=1 // pred_check
      _
    $region19: #{tpu_custom_call.1} parent=1 // pred_check_branch
      %63 = sbr.rel (0) target = $region21
    $region20: #{tpu_custom_call.1} parent=1 // pred_region
      %s65 = ssub.s32 128, 128
      %66 = vsyncadd [#allocation7], %s65
      %s68 = sshll.u32 [#allocation6], 4
      %s69 = int_to_ptr.vmem [resolvable:$true] %s68
      %71 = dma.vmem_to_hbm [thread:$0]  %s69, 128, %s2, [#allocation7]
    $region21: #{tpu_custom_call.1} parent=1 // pred_fallthru
      _
    // Predicated region
    $region22: #{tpu_custom_call.1} parent=1 // pred_check
      _
    $region23: #{tpu_custom_call.1} parent=1 // pred_check_branch
      %73 = sbr.rel (0) target = $region25
    $region24: #{tpu_custom_call.1} parent=1 // pred_region
      %74 = dma.done [#allocation4], 128
    $region25: #{tpu_custom_call.1} parent=1 // pred_fallthru
      _
    // Predicated region
    $region26: #{tpu_custom_call.1} parent=1 // pred_check
      _
    $region27: #{tpu_custom_call.1} parent=1 // pred_check_branch
      %76 = sbr.rel (0) target = $region29
    $region28: #{tpu_custom_call.1} parent=1 // pred_region
      %77 = dma.done [#allocation7], 128
    $region29: #{tpu_custom_call.1} parent=1 // pred_fallthru
      _
    %78 = vsyncpa [#allocation3], 1
    %79 = vsyncpa [#allocation4], 1
    %80 = vsyncpa [#allocation7], 1

</llo_original>
